<compile_context>
chip_gen: v7x
topology: tpu7x:2x2x1
jax: 0.10.0
libtpu: 0.0.40
codegen_flags: <defaults>
</compile_context>

<pallas_src>
import functools

import jax
import jax.numpy as jnp
from jax.experimental import pallas as pl
from jax.experimental.pallas import tpu as pltpu

EPS = 1e-5


# ----------------------------------------------------------------------------
# helpers
# ----------------------------------------------------------------------------
def _cdiv(a, b):
    return -(-a // b)


def _round_up(a, m):
    return _cdiv(a, m) * m


def _sublane(itemsize):
    # sublane tile height per dtype width: f32 -> 8, bf16 -> 16, int8/fp8 -> 32
    return {4: 8, 2: 16, 1: 32}.get(itemsize, 8)


def _vmem_capacity_bytes():
    try:
        return int(pltpu.get_tpu_info().vmem_capacity_bytes)
    except Exception:
        return 64 * 1024 * 1024  # conservative default (v7x per-TensorCore)


def _budgets():
    cap = _vmem_capacity_bytes()
    vmem_limit = (cap * 3) // 4        # ~96 MiB on v5e/v6e, ~48 MiB on v7x
    tile_budget = vmem_limit // 2      # double-buffered tiles + f32 temporaries
    return tile_budget, vmem_limit


def _choose_tb_rows(B, D, itemsize, tile_budget, sub):
    # Per row: double-buffered in + out tiles (2 * 2 * itemsize bytes/elt) plus
    # ~2 full-width f32 temporaries live in the body (cast x, centered x-mu).
    per_row = D * (4 * itemsize + 8)
    tb_mem = max(tile_budget // max(per_row, 1), 1)
    tb_pipe = _cdiv(B, 4)              # >= ~4 pipeline steps / 2-TC sharding
    tb = min(tb_mem, tb_pipe, 1024)
    tb = max((tb // sub) * sub, sub)   # sublane-tile aligned
    if tb >= B:
        return B                       # single block: full-dim exemption
    return tb


def _choose_wide_tiles(B, D, itemsize, tile_budget, sub, td_override=None):
    per_elem = 4 * itemsize + 8
    if td_override is not None:
        td = _round_up(max(int(td_override), 1), 128)
    else:
        td = (tile_budget // (4 * sub * per_elem)) // 128 * 128
        td = max(td, 128)
    td = min(td, _round_up(D, 128))
    tb = tile_budget // max(td * per_elem, 1)
    tb = max((tb // sub) * sub, sub)
    tb = min(tb, 1024)
    if tb >= B:
        tb = B
    return tb, td


# ----------------------------------------------------------------------------
# narrow path: whole rows fit in a VMEM tile (grid over batch only)
# ----------------------------------------------------------------------------
def _ln_rows_kernel(x_ref, o_ref, *, inv_d):
    """Block (TB, D). Identity affine (late-init state): skip *gamma + beta."""
    x = x_ref[...].astype(jnp.float32)
    mu = jnp.sum(x, axis=-1, keepdims=True) * inv_d
    xc = x - mu
    var = jnp.sum(xc * xc, axis=-1, keepdims=True) * inv_d   # centered variance
    o_ref[...] = (xc * jax.lax.rsqrt(var + EPS)).astype(o_ref.dtype)


def _ln_rows_affine_kernel(x_ref, g_ref, b_ref, o_ref, *, inv_d):
    x = x_ref[...].astype(jnp.float32)
    mu = jnp.sum(x, axis=-1, keepdims=True) * inv_d
    xc = x - mu
    var = jnp.sum(xc * xc, axis=-1, keepdims=True) * inv_d
    y = xc * jax.lax.rsqrt(var + EPS)
    y = y * g_ref[...].astype(jnp.float32) + b_ref[...].astype(jnp.float32)
    o_ref[...] = y.astype(o_ref.dtype)


# ----------------------------------------------------------------------------
# wide path: rows too wide for VMEM -> two passes, grid over (batch, feature)
# ----------------------------------------------------------------------------
def _ln_stats_kernel(x_ref, mu_ref, rstd_ref, sum_sc, sq_sc, *, d_total, td):
    """Pass 1: accumulate sum / sum-of-squares over D chunks (reduction axis
    last, 'arbitrary'); finalize mu / rstd on the last chunk."""
    j = pl.program_id(1)

    @pl.when(j == 0)
    def _():
        sum_sc[...] = jnp.zeros_like(sum_sc)
        sq_sc[...] = jnp.zeros_like(sq_sc)

    x = x_ref[...].astype(jnp.float32)
    col = j * td + jax.lax.broadcasted_iota(jnp.int32, x.shape, 1)
    x = jnp.where(col < d_total, x, 0.0)      # mask the ragged last D chunk
    sum_sc[...] += jnp.sum(x, axis=-1, keepdims=True)
    sq_sc[...] += jnp.sum(x * x, axis=-1, keepdims=True)

    @pl.when(j == pl.num_programs(1) - 1)
    def _():
        inv_d = 1.0 / float(d_total)
        mu = sum_sc[...] * inv_d
        var = jnp.maximum(sq_sc[...] * inv_d - mu * mu, 0.0)
        mu_ref[...] = mu
        rstd_ref[...] = jax.lax.rsqrt(var + EPS)


def _ln_norm_kernel(x_ref, mu_ref, rstd_ref, o_ref):
    x = x_ref[...].astype(jnp.float32)
    o_ref[...] = ((x - mu_ref[...]) * rstd_ref[...]).astype(o_ref.dtype)


def _ln_norm_affine_kernel(x_ref, mu_ref, rstd_ref, g_ref, b_ref, o_ref):
    x = x_ref[...].astype(jnp.float32)
    y = (x - mu_ref[...]) * rstd_ref[...]
    y = y * g_ref[...].astype(jnp.float32) + b_ref[...].astype(jnp.float32)
    o_ref[...] = y.astype(o_ref.dtype)


# ----------------------------------------------------------------------------
# wrapper
# ----------------------------------------------------------------------------
def late_init_layer_norm(x, gamma=None, beta=None, *,
                         force_feature_tiled=False, feature_tile=None):
    """LayerNorm over all non-batch dims of x (eps=1e-5, biased variance).

    gamma/beta: feat-shaped or None (None == freshly late-initialized state,
    i.e. identity affine, which skips the affine work entirely)."""
    B = x.shape[0]
    D = 1
    for s in x.shape[1:]:
        D *= s
    x2 = x.reshape(B, D)

    itemsize = jnp.dtype(x.dtype).itemsize
    sub = _sublane(itemsize)
    tile_budget, vmem_limit = _budgets()

    apply_affine = (gamma is not None) or (beta is not None)
    if apply_affine:
        g = (jnp.ones(x.shape[1:], x.dtype) if gamma is None else gamma).reshape(1, D)
        b = (jnp.zeros(x.shape[1:], x.dtype) if beta is None else beta).reshape(1, D)

    per_row = D * (4 * itemsize + 8)
    wide = force_feature_tiled or (per_row * sub > tile_budget)

    if not wide:
        # ---------------- narrow path: batch-tiled, full rows per block -----
        TB = _choose_tb_rows(B, D, itemsize, tile_budget, sub)
        grid = (_cdiv(B, TB),)
        inv_d = 1.0 / float(D)
        x_spec = pl.BlockSpec((TB, D), lambda i: (i, 0))
        cost = pl.CostEstimate(
            flops=9 * B * D,
            transcendentals=B,
            bytes_accessed=2 * B * D * itemsize
            + (2 * D * itemsize if apply_affine else 0),
        )
        cparams = pltpu.CompilerParams(
            dimension_semantics=("parallel",),
            vmem_limit_bytes=vmem_limit,
        )
        if apply_affine:
            const_spec = pl.BlockSpec((1, D), lambda i: (0, 0))
            out = pl.pallas_call(
                functools.partial(_ln_rows_affine_kernel, inv_d=inv_d),
                out_shape=jax.ShapeDtypeStruct((B, D), x.dtype),
                grid=grid,
                in_specs=[x_spec, const_spec, const_spec],
                out_specs=x_spec,
                compiler_params=cparams,
                cost_estimate=cost,
            )(x2, g, b)
        else:
            out = pl.pallas_call(
                functools.partial(_ln_rows_kernel, inv_d=inv_d),
                out_shape=jax.ShapeDtypeStruct((B, D), x.dtype),
                grid=grid,
                in_specs=[x_spec],
                out_specs=x_spec,
                compiler_params=cparams,
                cost_estimate=cost,
            )(x2)
        return out.reshape(x.shape)

    # ---------------- wide path: feature-tiled two-pass LayerNorm -----------
    TB, TD = _choose_wide_tiles(B, D, itemsize, tile_budget, sub, feature_tile)
    nb, nd = _cdiv(B, TB), _cdiv(D, TD)
    x_spec = pl.BlockSpec((TB, TD), lambda i, j: (i, j))
    stat_spec = pl.BlockSpec((TB, 1), lambda i, j: (i, 0))

    mu, rstd = pl.pallas_call(
        functools.partial(_ln_stats_kernel, d_total=D, td=TD),
        out_shape=(jax.ShapeDtypeStruct((B, 1), jnp.float32),
                   jax.ShapeDtypeStruct((B, 1), jnp.float32)),
        grid=(nb, nd),
        in_specs=[x_spec],
        out_specs=(stat_spec, stat_spec),
        scratch_shapes=[pltpu.VMEM((TB, 1), jnp.float32),
                        pltpu.VMEM((TB, 1), jnp.float32)],
        compiler_params=pltpu.CompilerParams(
            dimension_semantics=("parallel", "arbitrary"),
            vmem_limit_bytes=vmem_limit,
        ),
        cost_estimate=pl.CostEstimate(
            flops=4 * B * D, transcendentals=B,
            bytes_accessed=B * D * itemsize + 8 * B),
    )(x2)

    norm_cparams = pltpu.CompilerParams(
        dimension_semantics=("parallel", "parallel"),
        vmem_limit_bytes=vmem_limit,
    )
    norm_cost = pl.CostEstimate(
        flops=(5 if apply_affine else 3) * B * D,
        transcendentals=0,
        bytes_accessed=2 * B * D * itemsize + 8 * B
        + (2 * D * itemsize if apply_affine else 0),
    )
    if apply_affine:
        gb_spec = pl.BlockSpec((1, TD), lambda i, j: (0, j))
        out = pl.pallas_call(
            _ln_norm_affine_kernel,
            out_shape=jax.ShapeDtypeStruct((B, D), x.dtype),
            grid=(nb, nd),
            in_specs=[x_spec, stat_spec, stat_spec, gb_spec, gb_spec],
            out_specs=x_spec,
            compiler_params=norm_cparams,
            cost_estimate=norm_cost,
        )(x2, mu, rstd, g, b)
    else:
        out = pl.pallas_call(
            _ln_norm_kernel,
            out_shape=jax.ShapeDtypeStruct((B, D), x.dtype),
            grid=(nb, nd),
            in_specs=[x_spec, stat_spec, stat_spec],
            out_specs=x_spec,
            compiler_params=norm_cparams,
            cost_estimate=norm_cost,
        )(x2, mu, rstd)
    return out.reshape(x.shape)


# ----------------------------------------------------------------------------
# tests
# ----------------------------------------------------------------------------
if __name__ == "__main__":
    key = jax.random.PRNGKey(0)
    k0, k1, k2, k3, k4, k5 = jax.random.split(key, 6)

    def ref_ln(x, gamma=None, beta=None):
        Bn = x.shape[0]
        xf = x.reshape(Bn, -1).astype(jnp.float32)
        mu = jnp.mean(xf, axis=-1, keepdims=True)
        var = jnp.mean((xf - mu) ** 2, axis=-1, keepdims=True)
        y = ((xf - mu) / jnp.sqrt(var + EPS)).reshape(x.shape)
        if gamma is not None:
            y = y * gamma
        if beta is not None:
            y = y + beta
        return y

    # 1) Late-init forward (identity affine) at the module-implied shape.
    x = jax.random.normal(k0, (2, 4, 16, 16), dtype=jnp.float32)
    y = late_init_layer_norm(x)
    jax.block_until_ready(y)
    assert jnp.allclose(y, ref_ln(x), atol=1e-4, rtol=1e-4)

    # 2) General affine path (params after training updates).
    gamma = 1.0 + 0.1 * jax.random.normal(k1, (4, 16, 16), dtype=jnp.float32)
    beta = 0.1 * jax.random.normal(k2, (4, 16, 16), dtype=jnp.float32)
    y2 = late_init_layer_norm(x, gamma, beta)
    jax.block_until_ready(y2)
    assert jnp.allclose(y2, ref_ln(x, gamma, beta), atol=1e-4, rtol=1e-4)

    # 3) Non-128-aligned feature size + ragged batch tiling (no wrapper pads).
    x3 = jax.random.normal(k3, (20, 37), dtype=jnp.float32)
    y3 = late_init_layer_norm(x3)
    jax.block_until_ready(y3)
    assert jnp.allclose(y3, ref_ln(x3), atol=1e-4, rtol=1e-4)

    # 4) bf16 input (sublane-16 alignment path), ragged batch blocks.
    x4 = jax.random.normal(k4, (20, 2, 64), dtype=jnp.bfloat16)
    y4 = late_init_layer_norm(x4)
    jax.block_until_ready(y4)
    assert jnp.allclose(y4.astype(jnp.float32), ref_ln(x4), atol=5e-2, rtol=5e-2)

    # 5) Feature-tiled two-pass path (forced small feature tile for coverage).
    x5 = jax.random.normal(k5, (12, 300), dtype=jnp.float32)
    y5 = late_init_layer_norm(x5, force_feature_tiled=True, feature_tile=128)
    jax.block_until_ready(y5)
    assert jnp.allclose(y5, ref_ln(x5), atol=1e-4, rtol=1e-4)

    print("KERNEL_OK")
</pallas_src>

<mosaic_0001>
module attributes {stable_mosaic.version = 11 : i64} {
  func.func @_ln_rows_kernel(%arg0: i32, %arg1: memref<2x1024xf32, #tpu.memory_space<vmem>>, %arg2: memref<2x1024xf32, #tpu.memory_space<vmem>>) attributes {dimension_semantics = [#tpu.dimension_semantics<parallel>], iteration_bounds = array<i64: 1>, scalar_prefetch = 0 : i64, scratch_operands = 0 : i64, tpu.core_type = #tpu.core_type<tc>, window_params = [{transform_indices = @transform_0, window_bounds = array<i64: 2, 1024>}, {transform_indices = @transform_1, window_bounds = array<i64: 2, 1024>}]} {
    %c0 = arith.constant 0 : index
    %c0_0 = arith.constant 0 : index
    %0 = vector.load %arg1[%c0, %c0_0] : memref<2x1024xf32, #tpu.memory_space<vmem>>, vector<2x1024xf32>
    %cst = arith.constant dense<0.000000e+00> : vector<2xf32>
    %1 = vector.multi_reduction <add>, %0, %cst [1] : vector<2x1024xf32> to vector<2xf32>
    %2 = vector.shape_cast %1 : vector<2xf32> to vector<2x1xf32>
    %cst_1 = arith.constant 9.765625E-4 : f32
    %3 = vector.broadcast %cst_1 : f32 to vector<2x1xf32>
    %4 = arith.mulf %2, %3 : vector<2x1xf32>
    %5 = vector.broadcast %4 : vector<2x1xf32> to vector<2x1024xf32>
    %6 = arith.subf %0, %5 : vector<2x1024xf32>
    %7 = arith.mulf %6, %6 : vector<2x1024xf32>
    %cst_2 = arith.constant dense<0.000000e+00> : vector<2xf32>
    %8 = vector.multi_reduction <add>, %7, %cst_2 [1] : vector<2x1024xf32> to vector<2xf32>
    %9 = vector.shape_cast %8 : vector<2xf32> to vector<2x1xf32>
    %cst_3 = arith.constant 9.765625E-4 : f32
    %10 = vector.broadcast %cst_3 : f32 to vector<2x1xf32>
    %11 = arith.mulf %9, %10 : vector<2x1xf32>
    %cst_4 = arith.constant 9.99999974E-6 : f32
    %12 = vector.broadcast %cst_4 : f32 to vector<2x1xf32>
    %13 = arith.addf %11, %12 : vector<2x1xf32>
    %14 = math.rsqrt %13 : vector<2x1xf32>
    %15 = vector.broadcast %14 : vector<2x1xf32> to vector<2x1024xf32>
    %16 = arith.mulf %6, %15 : vector<2x1024xf32>
    %c0_5 = arith.constant 0 : index
    %c0_6 = arith.constant 0 : index
    %17 = vector.load %arg2[%c0_5, %c0_6] : memref<2x1024xf32, #tpu.memory_space<vmem>>, vector<2x1024xf32>
    tpu.vector_store %arg2[%c0_5, %c0_6], %16 {strides = array<i32>} : memref<2x1024xf32, #tpu.memory_space<vmem>>, vector<2x1024xf32>,
    return
  }
  func.func @transform_0(%arg0: i32) -> (i32, i32) {
    %c0_i32 = arith.constant 0 : i32
    %c0_i32_0 = arith.constant 0 : i32
    return %arg0, %c0_i32 : i32, i32
  }
  func.func @transform_1(%arg0: i32) -> (i32, i32) {
    %c0_i32 = arith.constant 0 : i32
    %c0_i32_0 = arith.constant 0 : i32
    return %arg0, %c0_i32 : i32, i32
  }
}

</mosaic_0001>

<llo_original>
// kernel: tpu_custom_call.1
$region0: #{tpu_custom_call.1}
  #allocation0 [shape = 'u32[]', space=smem, size = 0x4, offset = 0x4, fixed_abs, tag = 'smem constant byte address 0x4 - core index']
  #allocation1 [shape = 'u32[144,128]{1,0:T(1,128)}', space=vmem, size = 0x12000, scoped, tag = 'internal scratch']
  %s0 = inlined_call_operand.hbm [shape: f32[2,1024], index: 0, kind: input, shape index: {}]
  %s1 = inlined_call_operand.hbm [shape: f32[2,1024], index: 1, kind: output, shape index: {}]
  %s2 = sld [smem:[#allocation0]]
  $region18: #{tpu_custom_call.1} parent=0
    _
  %s4 = ssub.s32 1, %s2
  %s5 = scalar_select 0, %s4, %s2
  $region1: #{tpu_custom_call.1} parent=0
    #allocation2 [shape = 'u8[8192]{0}', space=vmem, size = 0x2000, scoped, tag = 'input window, operand 0, single buffered']
    #allocation3 [shape = 's32[1]{0}', space=sflag, size = 0x4, scoped, tag = 'scoped memory for tpu_custom_call.1']
    #allocation4 [shape = 's32[1]{0}', space=sflag, size = 0x4, scoped, tag = 'scoped memory for tpu_custom_call.1']
    #allocation5 [shape = 'u8[8192]{0}', space=vmem, size = 0x2000, scoped, tag = 'output window, operand 0, single buffered']
    %6 = vsyncpa [#allocation3], 0
    %7 = vsyncpa [#allocation4], 0
    // Predicated region
    $region2: #{tpu_custom_call.1} parent=1 // pred_check
      _
    $region3: #{tpu_custom_call.1} parent=1 // pred_check_branch
      %9 = sbr.rel (0) target = $region5
    $region4: #{tpu_custom_call.1} parent=1 // pred_region
      %s11 = ssub.s32 256, 256
      %12 = vsyncadd [#allocation3], %s11
      %s14 = sshll.u32 [#allocation2], 4
      %s15 = int_to_ptr.vmem [resolvable:$true] %s14
      %17 = dma.hbm_to_vmem [thread:$0]  %s0, 256, %s15, [#allocation3]
    $region5: #{tpu_custom_call.1} parent=1 // pred_fallthru
      _
    // Predicated region
    $region6: #{tpu_custom_call.1} parent=1 // pred_check
      _
    $region7: #{tpu_custom_call.1} parent=1 // pred_check_branch
      %19 = sbr.rel (0) target = $region9
    $region8: #{tpu_custom_call.1} parent=1 // pred_region
      %20 = dma.done [#allocation3], 256
    $region9: #{tpu_custom_call.1} parent=1 // pred_fallthru
      _
    %v21 = vld [vmem:[#allocation2] sm:$0xff]
    %v22 = vld [vmem:[#allocation2 + $0x8] sm:$0xff]
    %v25 = vcombine.high %v21, %v21
    %v27 = vunpack.c.l.s4 1983009808
    %v28 = vunpack.c.0.s8 %v27
    %v29 = vlaneseq
    %v30 = vshrl.u32 %v29, 7
    %v31 = vsub.s32 %v28, %v30
    %v32 = vrot.slane %v21, %v31
    %v34 = vunpack.c.l.s4 1983009808
    %v35 = vunpack.c.0.s8 %v34
    %v36 = vlaneseq
    %v37 = vshrl.u32 %v36, 7
    %v38 = vsub.s32 %v35, %v37
    %v39 = vrot.slane %v25, %v38
    %v40 = vcombine.high %v32, %v32
    %v41 = vcombine.high %v39, %v39
    %v42 = vcombine.high %v22, %v22
    %v44 = vunpack.c.l.s4 1983009808
    %v45 = vunpack.c.0.s8 %v44
    %v46 = vlaneseq
    %v47 = vshrl.u32 %v46, 7
    %v48 = vsub.s32 %v45, %v47
    %v49 = vrot.slane %v22, %v48
    %v51 = vunpack.c.l.s4 1983009808
    %v52 = vunpack.c.0.s8 %v51
    %v53 = vlaneseq
    %v54 = vshrl.u32 %v53, 7
    %v55 = vsub.s32 %v52, %v54
    %v56 = vrot.slane %v42, %v55
    %v57 = vcombine.high %v49, %v49
    %v58 = vcombine.high %v56, %v56
    %vm67 = vcmask 1041408
    %v68 = vsel %vm67, %v32, 0.0
    %v69 = vsel %vm67, %v40, 0.0
    %v70 = vadd.f32 %v68, %v69
    %v71 = vsel %vm67, %v39, 0.0
    %v72 = vadd.f32 %v70, %v71
    %v73 = vsel %vm67, %v41, 0.0
    %v74 = vadd.f32 %v72, %v73
    %v75 = vsel %vm67, %v49, 0.0
    %v76 = vadd.f32 %v74, %v75
    %v77 = vsel %vm67, %v57, 0.0
    %v78 = vadd.f32 %v76, %v77
    %v79 = vsel %vm67, %v56, 0.0
    %v80 = vadd.f32 %v78, %v79
    %v81 = vsel %vm67, %v58, 0.0
    %v82 = vadd.f32 %v80, %v81
    %83 = vadd.xlane.f32.xlu0 %v82
    %v84 = vpop.xlane.xlu0 %83
    %v85 = vmul.f32 %v84, 0.0009765625
    %v88 = vunpack.c.l.s4 269488144
    %v89 = vunpack.c.0.s8 %v88
    %v90 = vlaneseq
    %v91 = vshrl.u32 %v90, 7
    %v92 = vsub.s32 %v89, %v91
    %v93 = vrot.slane %v85, %v92
    %v95 = vsub.f32 %v21, %v93
    %v96 = vsub.f32 %v22, %v93
    %v97 = vmul.f32 %v95, %v95
    %v98 = vmul.f32 %v96, %v96
    %v101 = vcombine.high %v97, %v97
    %v103 = vunpack.c.l.s4 1983009808
    %v104 = vunpack.c.0.s8 %v103
    %v105 = vlaneseq
    %v106 = vshrl.u32 %v105, 7
    %v107 = vsub.s32 %v104, %v106
    %v108 = vrot.slane %v97, %v107
    %v110 = vunpack.c.l.s4 1983009808
    %v111 = vunpack.c.0.s8 %v110
    %v112 = vlaneseq
    %v113 = vshrl.u32 %v112, 7
    %v114 = vsub.s32 %v111, %v113
    %v115 = vrot.slane %v101, %v114
    %v116 = vcombine.high %v108, %v108
    %v117 = vcombine.high %v115, %v115
    %v118 = vcombine.high %v98, %v98
    %v120 = vunpack.c.l.s4 1983009808
    %v121 = vunpack.c.0.s8 %v120
    %v122 = vlaneseq
    %v123 = vshrl.u32 %v122, 7
    %v124 = vsub.s32 %v121, %v123
    %v125 = vrot.slane %v98, %v124
    %v127 = vunpack.c.l.s4 1983009808
    %v128 = vunpack.c.0.s8 %v127
    %v129 = vlaneseq
    %v130 = vshrl.u32 %v129, 7
    %v131 = vsub.s32 %v128, %v130
    %v132 = vrot.slane %v118, %v131
    %v133 = vcombine.high %v125, %v125
    %v134 = vcombine.high %v132, %v132
    %v143 = vsel %vm67, %v108, 0.0
    %v144 = vsel %vm67, %v116, 0.0
    %v145 = vadd.f32 %v143, %v144
    %v146 = vsel %vm67, %v115, 0.0
    %v147 = vadd.f32 %v145, %v146
    %v148 = vsel %vm67, %v117, 0.0
    %v149 = vadd.f32 %v147, %v148
    %v150 = vsel %vm67, %v125, 0.0
    %v151 = vadd.f32 %v149, %v150
    %v152 = vsel %vm67, %v133, 0.0
    %v153 = vadd.f32 %v151, %v152
    %v154 = vsel %vm67, %v132, 0.0
    %v155 = vadd.f32 %v153, %v154
    %v156 = vsel %vm67, %v134, 0.0
    %v157 = vadd.f32 %v155, %v156
    %158 = vadd.xlane.f32.xlu0 %v157
    %v159 = vpop.xlane.xlu0 %158
    %v160 = vmul.f32 %v159, 0.0009765625
    %v161 = vadd.f32 %v160, 1e-05
    %v162 = vrsqrt.pop %v161
    %v165 = vunpack.c.l.s4 269488144
    %v166 = vunpack.c.0.s8 %v165
    %v167 = vlaneseq
    %v168 = vshrl.u32 %v167, 7
    %v169 = vsub.s32 %v166, %v168
    %v170 = vrot.slane %v162, %v169
    %v172 = vmul.f32 %v95, %v170
    %v173 = vmul.f32 %v96, %v170
    %174 = vst [vmem:[#allocation5] sm:$0xff] %v172
    %175 = vst [vmem:[#allocation5 + $0x8] sm:$0xff] %v173
    // Predicated region
    $region10: #{tpu_custom_call.1} parent=1 // pred_check
      _
    $region11: #{tpu_custom_call.1} parent=1 // pred_check_branch
      %177 = sbr.rel (0) target = $region13
    $region12: #{tpu_custom_call.1} parent=1 // pred_region
      %s179 = ssub.s32 256, 256
      %180 = vsyncadd [#allocation4], %s179
      %s182 = sshll.u32 [#allocation5], 4
      %s183 = int_to_ptr.vmem [resolvable:$true] %s182
      %185 = dma.vmem_to_hbm [thread:$0]  %s183, 256, %s1, [#allocation4]
    $region13: #{tpu_custom_call.1} parent=1 // pred_fallthru
      _
    // Predicated region
    $region14: #{tpu_custom_call.1} parent=1 // pred_check
      _
    $region15: #{tpu_custom_call.1} parent=1 // pred_check_branch
      %187 = sbr.rel (0) target = $region17
    $region16: #{tpu_custom_call.1} parent=1 // pred_region
      %188 = dma.done [#allocation4], 256
    $region17: #{tpu_custom_call.1} parent=1 // pred_fallthru
      _
    %189 = vsyncpa [#allocation3], 1
    %190 = vsyncpa [#allocation4], 1

</llo_original>
